<compile_context>
chip_gen: v5e
topology: v5e:2x2
jax: 0.10.0
libtpu: 0.0.40
codegen_flags: <defaults>
</compile_context>

<pallas_src>
import functools
import math

import jax
import jax.numpy as jnp
import numpy as np
from jax.experimental import pallas as pl
from jax.experimental.pallas import tpu as pltpu


# ----------------------------------------------------------------------------
# helpers: legal, MXU-friendly tile sizes + generation-aware VMEM budget
# ----------------------------------------------------------------------------
def _tile(dim, preferred, align):
    """Largest `align`-aligned divisor of `dim` <= `preferred`; falls back to the
    full dim when `dim` is small or has no aligned divisor."""
    if dim <= preferred or dim % align != 0:
        return dim
    t = preferred - (preferred % align)
    while t >= align:
        if dim % t == 0:
            return t
        t -= align
    return dim


def _divisor(dim, preferred):
    """Largest divisor of `dim` that is <= max(1, preferred)."""
    d = max(1, min(dim, preferred))
    while dim % d != 0:
        d -= 1
    return d


@functools.lru_cache(maxsize=None)
def _vmem_budget_bytes():
    """~75% of physical VMEM (generation aware), capped for safety."""
    try:
        cap = int(pltpu.get_tpu_info().vmem_capacity_bytes)
    except Exception:
        cap = 64 * 1024 * 1024          # conservative default (v7x physical VMEM)
    return min(int(cap * 3 // 4), 96 * 1024 * 1024)


def _compiler_params(dim_sems):
    return pltpu.CompilerParams(
        dimension_semantics=dim_sems,
        vmem_limit_bytes=_vmem_budget_bytes(),
    )


# ----------------------------------------------------------------------------
# Kernel 1: tiled linear layer  out = x @ W + b   (f32 accumulation)
# ----------------------------------------------------------------------------
def _linear_kernel(x_ref, w_ref, b_ref, o_ref, acc_ref):
    k = pl.program_id(2)

    @pl.when(k == 0)
    def _():
        acc_ref[...] = jnp.zeros(acc_ref.shape, acc_ref.dtype)

    # Cast the activation tile in-kernel (weights are already stored in the
    # compute dtype) -> no wrapper-side cast / extra HBM round trip.
    x = x_ref[...].astype(w_ref.dtype)
    acc_ref[...] += jnp.dot(x, w_ref[...], preferred_element_type=jnp.float32)

    @pl.when(k == pl.num_programs(2) - 1)
    def _():
        o_ref[...] = (acc_ref[...] + b_ref[...]).astype(o_ref.dtype)


def linear(x2d, w, b, *, tm=512, tn=512, tk=512, out_dtype=None):
    """x2d: (M, K) @ w: (K, N) + b: (N,) -> (M, N) in `out_dtype`."""
    M, K = x2d.shape
    N = w.shape[1]
    out_dtype = out_dtype if out_dtype is not None else x2d.dtype
    b2d = b.astype(jnp.float32).reshape(1, N)

    # Row (M) axis: pad so we never fall back to a whole-matrix block.
    if M > tm:
        pad = (-M) % tm
        tm_ = tm
    else:
        pad = 0
        tm_ = M
    if pad:
        x2d = jnp.pad(x2d, ((0, pad), (0, 0)))
    Mp = M + pad

    # N / K are weight dims (usually multiples of 128); full-dim fallback otherwise.
    tn_ = _tile(N, tn, 128)
    tk_ = _tile(K, tk, 128)
    grid = (Mp // tm_, N // tn_, K // tk_)

    out = pl.pallas_call(
        _linear_kernel,
        out_shape=jax.ShapeDtypeStruct((Mp, N), out_dtype),
        grid=grid,
        in_specs=[
            pl.BlockSpec((tm_, tk_), lambda i, j, k: (i, k)),
            pl.BlockSpec((tk_, tn_), lambda i, j, k: (k, j)),
            pl.BlockSpec((1, tn_), lambda i, j, k: (0, j)),
        ],
        out_specs=pl.BlockSpec((tm_, tn_), lambda i, j, k: (i, j)),
        scratch_shapes=[pltpu.VMEM((tm_, tn_), jnp.float32)],
        compiler_params=_compiler_params(("parallel", "parallel", "arbitrary")),
    )(x2d, w, b2d)
    return out[:M] if pad else out


# ----------------------------------------------------------------------------
# Kernel 2: flash-style attention (online softmax over Lk tiles) -> ctx, lse
# ----------------------------------------------------------------------------
def _flash_kernel(*refs, inv_scale, compute_dtype, has_mask):
    if has_mask:
        (q_ref, k_ref, v_ref, m_ref, ctx_ref, lse_ref,
         m_sc, l_sc, acc_sc) = refs
    else:
        (q_ref, k_ref, v_ref, ctx_ref, lse_ref,
         m_sc, l_sc, acc_sc) = refs

    kv = pl.program_id(3)

    @pl.when(kv == 0)
    def _():
        m_sc[...] = jnp.full(m_sc.shape, -jnp.inf, m_sc.dtype)
        l_sc[...] = jnp.zeros(l_sc.shape, l_sc.dtype)
        acc_sc[...] = jnp.zeros(acc_sc.shape, acc_sc.dtype)

    q = q_ref[0]                         # (hb, tq, dk)
    k = k_ref[0]                         # (hb, tkv, dk)
    v = v_ref[0]                         # (hb, tkv, dv)
    if compute_dtype is not None:
        q = q.astype(compute_dtype)
        k = k.astype(compute_dtype)
        v = v.astype(compute_dtype)
    q = q * inv_scale                    # fold 1/sqrt(d_k) into Q (cheap: tq*dk muls)

    s = jnp.einsum("hqd,hkd->hqk", q, k, preferred_element_type=jnp.float32)
    if has_mask:
        s = jnp.where(m_ref[0] == 0.0, -1e9, s)      # masked_fill(mask == 0, -1e9)

    m_prev = m_sc[...]
    m_new = jnp.maximum(m_prev, jnp.max(s, axis=-1, keepdims=True))
    alpha = jnp.exp(m_prev - m_new)
    p = jnp.exp(s - m_new)
    l_sc[...] = alpha * l_sc[...] + jnp.sum(p, axis=-1, keepdims=True)
    acc_sc[...] = alpha * acc_sc[...] + jnp.einsum(
        "hqk,hkd->hqd", p.astype(v.dtype), v, preferred_element_type=jnp.float32)
    m_sc[...] = m_new

    @pl.when(kv == pl.num_programs(3) - 1)
    def _():
        inv_l = pl.reciprocal(l_sc[...], approx=True)      # EUP reciprocal
        ctx_ref[0] = (acc_sc[...] * inv_l).astype(ctx_ref.dtype)
        lse_ref[0] = m_sc[...] + jnp.log(l_sc[...])


# ----------------------------------------------------------------------------
# Kernel 3: attention weights on demand  attn = exp(s - lse)  (Lk-tiled)
# ----------------------------------------------------------------------------
def _attn_weights_kernel(*refs, inv_scale, compute_dtype, has_mask):
    if has_mask:
        q_ref, k_ref, lse_ref, m_ref, attn_ref = refs
    else:
        q_ref, k_ref, lse_ref, attn_ref = refs

    q = q_ref[0]
    k = k_ref[0]
    if compute_dtype is not None:
        q = q.astype(compute_dtype)
        k = k.astype(compute_dtype)
    q = q * inv_scale
    s = jnp.einsum("hqd,hkd->hqk", q, k, preferred_element_type=jnp.float32)
    if has_mask:
        s = jnp.where(m_ref[0] == 0.0, -1e9, s)
    attn_ref[0] = jnp.exp(s - lse_ref[0]).astype(attn_ref.dtype)


# ----------------------------------------------------------------------------
# attention wrapper
# ----------------------------------------------------------------------------
def _normalize_mask(mask, B, H, Lq, Lk):
    """Return mask with shape (B, Hm, Lq, Lk), Hm in {1, H} (no head broadcast)."""
    m = (jnp.asarray(mask) != 0).astype(jnp.float32)
    if m.ndim == 2:
        m = m[None, None]
    elif m.ndim == 3:
        m = m[:, None]
    elif m.ndim != 4:
        raise ValueError(f"unsupported mask rank {m.ndim}")
    Hm = H if (H > 1 and m.shape[1] == H) else 1
    m = jnp.broadcast_to(m, (B, Hm, Lq, Lk))
    return m, Hm


def _attn_tiles(H, Lq, Lk, dk, dv, itemsize, has_mask):
    """Pick (hb, tq, tkv) so the double-buffered working set fits the VMEM budget."""
    budget = _vmem_budget_bytes()
    tq = _tile(Lq, 256, 8)
    tkv = _tile(Lk, 512, 128)
    hb = _divisor(H, 8)

    def step_bytes(hb_, tq_):
        by = 2 * hb_ * tq_ * dk * itemsize             # Q (double-buffered)
        by += 2 * hb_ * tkv * (dk + dv) * itemsize     # K, V
        if has_mask:
            by += 2 * tq_ * tkv * 4                    # mask tile (head-unbroadcast)
        by += 2 * hb_ * tq_ * (dv * itemsize + 4)      # ctx + lse outputs
        by += hb_ * tq_ * (dv + 2) * 4                 # f32 scratch (m, l, acc)
        return by

    while step_bytes(hb, tq) > budget and hb > 1:
        hb = _divisor(H, max(1, hb // 2))
    while step_bytes(hb, tq) > budget and tq > 8:
        new_tq = _tile(Lq, max(8, tq // 2), 8)
        if new_tq == tq:
            break
        tq = new_tq
    return hb, tq, tkv


def attention(q, k, v, inv_scale, mask=None, *, need_weights=True,
              compute_dtype=None):
    """q: (B,H,Lq,dk), k: (B,H,Lk,dk), v: (B,H,Lk,dv) -> (ctx, attn|None)."""
    B, H, Lq, dk = q.shape
    Lk = k.shape[2]
    dv = v.shape[3]
    out_dtype = q.dtype
    itemsize = jnp.dtype(out_dtype).itemsize

    has_mask = mask is not None
    hb, tq, tkv = _attn_tiles(H, Lq, Lk, dk, dv, itemsize, has_mask)
    grid = (B, H // hb, Lq // tq, Lk // tkv)

    in_specs = [
        pl.BlockSpec((1, hb, tq, dk), lambda b, h, qi, kv: (b, h, qi, 0)),
        pl.BlockSpec((1, hb, tkv, dk), lambda b, h, qi, kv: (b, h, kv, 0)),
        pl.BlockSpec((1, hb, tkv, dv), lambda b, h, qi, kv: (b, h, kv, 0)),
    ]
    inputs = [q, k, v]
    mask_spec = None
    mask_nh = None
    if has_mask:
        mask_nh, Hm = _normalize_mask(mask, B, H, Lq, Lk)
        if Hm == 1:
            mask_spec = pl.BlockSpec((1, 1, tq, tkv),
                                     lambda b, h, qi, kv: (b, 0, qi, kv))
        else:
            mask_spec = pl.BlockSpec((1, hb, tq, tkv),
                                     lambda b, h, qi, kv: (b, h, qi, kv))
        in_specs.append(mask_spec)
        inputs.append(mask_nh)

    flash = functools.partial(_flash_kernel, inv_scale=inv_scale,
                              compute_dtype=compute_dtype, has_mask=has_mask)
    ctx, lse = pl.pallas_call(
        flash,
        out_shape=(
            jax.ShapeDtypeStruct((B, H, Lq, dv), out_dtype),
            jax.ShapeDtypeStruct((B, H, Lq, 1), jnp.float32),
        ),
        grid=grid,
        in_specs=in_specs,
        out_specs=(
            pl.BlockSpec((1, hb, tq, dv), lambda b, h, qi, kv: (b, h, qi, 0)),
            pl.BlockSpec((1, hb, tq, 1), lambda b, h, qi, kv: (b, h, qi, 0)),
        ),
        scratch_shapes=[
            pltpu.VMEM((hb, tq, 1), jnp.float32),    # running max
            pltpu.VMEM((hb, tq, 1), jnp.float32),    # running denominator
            pltpu.VMEM((hb, tq, dv), jnp.float32),   # running context accumulator
        ],
        compiler_params=_compiler_params(
            ("parallel", "parallel", "parallel", "arbitrary")),
    )(*inputs)

    attn = None
    if need_weights:
        w_in_specs = [
            pl.BlockSpec((1, hb, tq, dk), lambda b, h, qi, kv: (b, h, qi, 0)),
            pl.BlockSpec((1, hb, tkv, dk), lambda b, h, qi, kv: (b, h, kv, 0)),
            pl.BlockSpec((1, hb, tq, 1), lambda b, h, qi, kv: (b, h, qi, 0)),
        ]
        w_inputs = [q, k, lse]
        if has_mask:
            w_in_specs.append(mask_spec)
            w_inputs.append(mask_nh)
        wkernel = functools.partial(_attn_weights_kernel, inv_scale=inv_scale,
                                    compute_dtype=compute_dtype, has_mask=has_mask)
        attn = pl.pallas_call(
            wkernel,
            out_shape=jax.ShapeDtypeStruct((B, H, Lq, Lk), out_dtype),
            grid=grid,
            in_specs=w_in_specs,
            out_specs=pl.BlockSpec((1, hb, tq, tkv),
                                   lambda b, h, qi, kv: (b, h, qi, kv)),
            compiler_params=_compiler_params(
                ("parallel", "parallel", "parallel", "parallel")),
        )(*w_inputs)
    return ctx, attn


# ----------------------------------------------------------------------------
# Module wrapper
# ----------------------------------------------------------------------------
class MultiHeadAttentionPallas:
    def __init__(self, n_heads, d_model, d_k, d_v, key, dropout=0.1,
                 compute_dtype=None):
        self.n_heads = n_heads
        self.d_model = d_model
        self.d_k = d_k
        self.d_v = d_v
        self.dropout = dropout            # eval mode: identity
        self.compute_dtype = compute_dtype
        # Intended scale (the module's `self.head_dim` attribute does not exist).
        self.scale = float(math.sqrt(d_k))
        self.inv_scale = 1.0 / self.scale

        ks = jax.random.split(key, 8)

        def init_linear(kw, kb, fan_in, fan_out):
            bound = 1.0 / math.sqrt(fan_in)
            w = jax.random.uniform(kw, (fan_in, fan_out), jnp.float32, -bound, bound)
            b = jax.random.uniform(kb, (fan_out,), jnp.float32, -bound, bound)
            return w, b

        # f32 masters (used by the pure-JAX reference) ...
        self.wq_f32, self.bq = init_linear(ks[0], ks[1], d_model, d_k * n_heads)
        self.wk_f32, self.bk = init_linear(ks[2], ks[3], d_model, d_k * n_heads)
        self.wv_f32, self.bv = init_linear(ks[4], ks[5], d_model, d_v * n_heads)
        self.wo_f32, self.bo = init_linear(ks[6], ks[7], d_v * n_heads, d_model)

        # ... and compute-dtype copies cast ONCE at init (not per forward call).
        wdt = compute_dtype if compute_dtype is not None else jnp.float32
        self.wq = self.wq_f32.astype(wdt)
        self.wk = self.wk_f32.astype(wdt)
        self.wv = self.wv_f32.astype(wdt)
        self.wo = self.wo_f32.astype(wdt)
        # Fused QKV weights for the self-attention fast path (x read from HBM once).
        self.w_qkv = jnp.concatenate([self.wq, self.wk, self.wv], axis=1)
        self.b_qkv = jnp.concatenate([self.bq, self.bk, self.bv], axis=0)

    def __call__(self, query, key, value, mask=None, need_weights=True):
        B, Lq, _ = query.shape
        Lk = key.shape[1]
        Lv = value.shape[1]
        assert Lk == Lv, "key/value sequence lengths must match (as in the module)"
        H, dk, dv = self.n_heads, self.d_k, self.d_v
        cd = self.compute_dtype
        proj_dtype = cd if cd is not None else query.dtype

        if query is key and key is value:
            # Self-attention: one fused projection instead of three.
            # (Keys on object identity; under jit with separately-passed identical
            #  arrays it simply doesn't trigger — results are unchanged.)
            qkv = linear(query.reshape(B * Lq, self.d_model),
                         self.w_qkv, self.b_qkv, out_dtype=proj_dtype)
            Q = qkv[:, :H * dk]
            K = qkv[:, H * dk:2 * H * dk]
            V = qkv[:, 2 * H * dk:]
        else:
            Q = linear(query.reshape(B * Lq, self.d_model), self.wq, self.bq,
                       out_dtype=proj_dtype)
            K = linear(key.reshape(B * Lk, self.d_model), self.wk, self.bk,
                       out_dtype=proj_dtype)
            V = linear(value.reshape(B * Lv, self.d_model), self.wv, self.bv,
                       out_dtype=proj_dtype)

        # Head split: [B, L, H*d] -> [B, H, L, d].
        # TODO(synk): fold split/merge into the kernels with lane-dense
        # (1, tq, hb*d) blocks + in-kernel relayout and benchmark vs the saved HBM passes.
        Q = Q.reshape(B, Lq, H, dk).transpose(0, 2, 1, 3)
        K = K.reshape(B, Lk, H, dk).transpose(0, 2, 1, 3)
        V = V.reshape(B, Lv, H, dv).transpose(0, 2, 1, 3)

        # TODO(synk): train-mode dropout on the attention weights (eval = identity).
        ctx, attn = attention(Q, K, V, self.inv_scale, mask=mask,
                              need_weights=need_weights, compute_dtype=cd)

        # Merge heads: [B, H, Lq, dv] -> [B*Lq, H*dv], then output projection.
        ctx = ctx.transpose(0, 2, 1, 3).reshape(B * Lq, H * dv)
        out = linear(ctx, self.wo, self.bo, out_dtype=query.dtype)
        return out.reshape(B, Lq, self.d_model), attn


# ----------------------------------------------------------------------------
# Pure-JAX reference for sanity checking (uses the f32 master weights).
# ----------------------------------------------------------------------------
def reference_forward(m, query, key, value, mask=None):
    B, Lq, _ = query.shape
    Lk = key.shape[1]
    H, dk, dv = m.n_heads, m.d_k, m.d_v
    Q = (query @ m.wq_f32 + m.bq).reshape(B, Lq, H, dk).transpose(0, 2, 1, 3)
    K = (key @ m.wk_f32 + m.bk).reshape(B, Lk, H, dk).transpose(0, 2, 1, 3)
    V = (value @ m.wv_f32 + m.bv).reshape(B, Lk, H, dv).transpose(0, 2, 1, 3)
    s = jnp.einsum("bhqd,bhkd->bhqk", Q, K) / m.scale
    if mask is not None:
        s = jnp.where(jnp.asarray(mask) == 0, -1e9, s)
    a = jax.nn.softmax(s, axis=-1)
    ctx = jnp.einsum("bhqk,bhkd->bhqd", a, V)
    ctx = ctx.transpose(0, 2, 1, 3).reshape(B, Lq, H * dv)
    out = ctx @ m.wo_f32 + m.bo
    return out, a


if __name__ == "__main__":
    # Small deterministic example: batch=2, seq=8, d_model=32, 4 heads, d_k=d_v=8.
    B, L, D_MODEL, N_HEADS, D_K, D_V = 2, 8, 32, 4, 8, 8
    root = jax.random.PRNGKey(0)
    k_params, kq, kk, kv = jax.random.split(root, 4)

    module = MultiHeadAttentionPallas(N_HEADS, D_MODEL, D_K, D_V, k_params)

    query = jax.random.normal(kq, (B, L, D_MODEL), jnp.float32)
    key = jax.random.normal(kk, (B, L, D_MODEL), jnp.float32)
    value = jax.random.normal(kv, (B, L, D_MODEL), jnp.float32)

    # 1) distinct query/key/value, no mask.
    out, attn = module(query, key, value)
    out = jax.block_until_ready(out)
    attn = jax.block_until_ready(attn)
    ref_out, ref_attn = reference_forward(module, query, key, value)
    assert out.shape == (B, L, D_MODEL)
    assert attn.shape == (B, N_HEADS, L, L)
    np.testing.assert_allclose(np.asarray(out), np.asarray(ref_out), rtol=2e-3, atol=2e-3)
    np.testing.assert_allclose(np.asarray(attn), np.asarray(ref_attn), rtol=2e-3, atol=2e-3)

    # 2) self-attention (fused QKV path) with a causal mask.
    causal = jnp.asarray(np.tril(np.ones((L, L), np.float32)))
    out2, attn2 = module(query, query, query, mask=causal)
    out2 = jax.block_until_ready(out2)
    ref_out2, ref_attn2 = reference_forward(module, query, query, query, mask=causal)
    np.testing.assert_allclose(np.asarray(out2), np.asarray(ref_out2), rtol=2e-3, atol=2e-3)
    np.testing.assert_allclose(np.asarray(attn2), np.asarray(ref_attn2), rtol=2e-3, atol=2e-3)

    # 3) ctx-only path (skips the O(L^2) attention-weights write entirely).
    out4, attn4 = module(query, key, value, need_weights=False)
    out4 = jax.block_until_ready(out4)
    assert attn4 is None
    np.testing.assert_allclose(np.asarray(out4), np.asarray(ref_out), rtol=2e-3, atol=2e-3)

    # 4) bf16-operand / f32-accumulation path (MXU peak; bf16 Q/K/V/ctx/attn streams).
    module_bf16 = MultiHeadAttentionPallas(N_HEADS, D_MODEL, D_K, D_V, k_params,
                                           compute_dtype=jnp.bfloat16)
    out3, attn3 = module_bf16(query, key, value)
    out3 = jax.block_until_ready(out3)
    np.testing.assert_allclose(np.asarray(out3), np.asarray(ref_out), rtol=1.5e-1, atol=1.5e-1)

    print("KERNEL_OK")
</pallas_src>

<mosaic_0001>
module attributes {stable_mosaic.version = 11 : i64} {
  func.func @_linear_kernel(%arg0: i32, %arg1: i32, %arg2: i32, %arg3: memref<16x32xf32, #tpu.memory_space<vmem>>, %arg4: memref<32x32xf32, #tpu.memory_space<vmem>>, %arg5: memref<1x32xf32, #tpu.memory_space<vmem>>, %arg6: memref<16x32xf32, #tpu.memory_space<vmem>>, %arg7: memref<16x32xf32, #tpu.memory_space<vmem>>) attributes {dimension_semantics = [#tpu.dimension_semantics<parallel>, #tpu.dimension_semantics<parallel>, #tpu.dimension_semantics<arbitrary>], iteration_bounds = array<i64: 1, 1, 1>, scalar_prefetch = 0 : i64, scratch_operands = 1 : i64, tpu.core_type = #tpu.core_type<tc>, window_params = [{transform_indices = @transform_0, window_bounds = array<i64: 16, 32>}, {transform_indices = @transform_1, window_bounds = array<i64: 32, 32>}, {transform_indices = @transform_2, window_bounds = array<i64: 1, 32>}, {transform_indices = @transform_3, window_bounds = array<i64: 16, 32>}]} {
    %c0_i32 = arith.constant 0 : i32
    %0 = arith.cmpi eq, %arg2, %c0_i32 : i32
    %1 = arith.extui %0 : i1 to i32
    %c0_i32_0 = arith.constant 0 : i32
    %2 = arith.cmpi ne, %1, %c0_i32_0 : i32
    scf.if %2 {
      %cst_10 = arith.constant 0.000000e+00 : f32
      %12 = vector.broadcast %cst_10 : f32 to vector<16x32xf32>
      %c0_11 = arith.constant 0 : index
      %c0_12 = arith.constant 0 : index
      %13 = vector.load %arg7[%c0_11, %c0_12] : memref<16x32xf32, #tpu.memory_space<vmem>>, vector<16x32xf32>
      tpu.vector_store %arg7[%c0_11, %c0_12], %12 {strides = array<i32>} : memref<16x32xf32, #tpu.memory_space<vmem>>, vector<16x32xf32>,
    } else {
    }
    %c0 = arith.constant 0 : index
    %c0_1 = arith.constant 0 : index
    %3 = vector.load %arg3[%c0, %c0_1] : memref<16x32xf32, #tpu.memory_space<vmem>>, vector<16x32xf32>
    %c0_2 = arith.constant 0 : index
    %c0_3 = arith.constant 0 : index
    %4 = vector.load %arg7[%c0_2, %c0_3] : memref<16x32xf32, #tpu.memory_space<vmem>>, vector<16x32xf32>
    %c0_4 = arith.constant 0 : index
    %c0_5 = arith.constant 0 : index
    %5 = vector.load %arg4[%c0_4, %c0_5] : memref<32x32xf32, #tpu.memory_space<vmem>>, vector<32x32xf32>
    %cst = arith.constant dense<0.000000e+00> : vector<16x32xf32>
    %6 = tpu.matmul %3, %5, %cst {dimension_numbers = #tpu.dot_dimension_numbers<[1], [0], [0], [1], [0, 0, 1, 1], [], []>} : vector<16x32xf32>, vector<32x32xf32>, vector<16x32xf32> -> vector<16x32xf32>
    %7 = arith.addf %4, %6 : vector<16x32xf32>
    %c0_6 = arith.constant 0 : index
    %c0_7 = arith.constant 0 : index
    %8 = vector.load %arg7[%c0_6, %c0_7] : memref<16x32xf32, #tpu.memory_space<vmem>>, vector<16x32xf32>
    tpu.vector_store %arg7[%c0_6, %c0_7], %7 {strides = array<i32>} : memref<16x32xf32, #tpu.memory_space<vmem>>, vector<16x32xf32>,
    %c0_i32_8 = arith.constant 0 : i32
    %9 = arith.cmpi eq, %arg2, %c0_i32_8 : i32
    %10 = arith.extui %9 : i1 to i32
    %c0_i32_9 = arith.constant 0 : i32
    %11 = arith.cmpi ne, %10, %c0_i32_9 : i32
    scf.if %11 {
      %c0_10 = arith.constant 0 : index
      %c0_11 = arith.constant 0 : index
      %12 = vector.load %arg7[%c0_10, %c0_11] : memref<16x32xf32, #tpu.memory_space<vmem>>, vector<16x32xf32>
      %c0_12 = arith.constant 0 : index
      %c0_13 = arith.constant 0 : index
      %13 = vector.load %arg5[%c0_12, %c0_13] : memref<1x32xf32, #tpu.memory_space<vmem>>, vector<1x32xf32>
      %14 = vector.broadcast %13 : vector<1x32xf32> to vector<16x32xf32>
      %15 = arith.addf %12, %14 : vector<16x32xf32>
      %c0_14 = arith.constant 0 : index
      %c0_15 = arith.constant 0 : index
      %16 = vector.load %arg6[%c0_14, %c0_15] : memref<16x32xf32, #tpu.memory_space<vmem>>, vector<16x32xf32>
      tpu.vector_store %arg6[%c0_14, %c0_15], %15 {strides = array<i32>} : memref<16x32xf32, #tpu.memory_space<vmem>>, vector<16x32xf32>,
    } else {
    }
    return
  }
  func.func @transform_0(%arg0: i32, %arg1: i32, %arg2: i32) -> (i32, i32) {
    %c0_i32 = arith.constant 0 : i32
    return %arg0, %arg2 : i32, i32
  }
  func.func @transform_1(%arg0: i32, %arg1: i32, %arg2: i32) -> (i32, i32) {
    %c0_i32 = arith.constant 0 : i32
    return %arg2, %arg1 : i32, i32
  }
  func.func @transform_2(%arg0: i32, %arg1: i32, %arg2: i32) -> (i32, i32) {
    %c0_i32 = arith.constant 0 : i32
    %c0_i32_0 = arith.constant 0 : i32
    return %c0_i32, %arg1 : i32, i32
  }
  func.func @transform_3(%arg0: i32, %arg1: i32, %arg2: i32) -> (i32, i32) {
    %c0_i32 = arith.constant 0 : i32
    return %arg0, %arg1 : i32, i32
  }
}

</mosaic_0001>

<llo_original>
// kernel: tpu_custom_call.1
$region0: #{tpu_custom_call.1}
  #allocation0 [shape = 'u32[]', space=smem, size = 0x4, offset = 0x4, fixed_abs, tag = 'smem constant byte address 0x4 - core index']
  #allocation1 [shape = 'u32[72,128]{1,0:T(1,128)}', space=vmem, size = 0x9000, scoped, tag = 'internal scratch']
  #allocation2 [shape = 'f32[16,32]{1,0:T(8,128)}', space=vmem, size = 0x2000, scoped, tag = 'scratch operand']
  %s0 = inlined_call_operand.hbm [shape: f32[16,32], index: 0, kind: input, shape index: {}]
  %s1 = inlined_call_operand.hbm [shape: f32[32,32], index: 1, kind: input, shape index: {}]
  %s2 = inlined_call_operand.vmem [shape: f32[1,32], index: 2, kind: input, shape index: {}]
  %s3 = inlined_call_operand.hbm [shape: f32[16,32], index: 3, kind: output, shape index: {}]
  %s4 = sld [smem:[#allocation0]]
  $region38: #{tpu_custom_call.1} parent=0
    _
  %s6 = ssub.s32 1, %s4
  %s7 = scalar_select 0, %s6, %s4
  $region1: #{tpu_custom_call.1} parent=0
    #allocation3 [shape = 'u8[8192]{0}', space=vmem, size = 0x2000, scoped, tag = 'input window, operand 0, single buffered']
    #allocation4 [shape = 's32[1]{0}', space=sflag, size = 0x4, scoped, tag = 'scoped memory for tpu_custom_call.1']
    #allocation5 [shape = 's32[1]{0}', space=sflag, size = 0x4, scoped, tag = 'scoped memory for tpu_custom_call.1']
    #allocation6 [shape = 'u8[16384]{0}', space=vmem, size = 0x4000, scoped, tag = 'input window, operand 1, single buffered']
    #allocation7 [shape = 's32[1]{0}', space=sflag, size = 0x4, scoped, tag = 'scoped memory for tpu_custom_call.1']
    #allocation8 [shape = 'u8[8192]{0}', space=vmem, size = 0x2000, scoped, tag = 'output window, operand 0, single buffered']
    %8 = vsyncpa [#allocation4], 0
    %9 = vsyncpa [#allocation7], 0
    %10 = vsyncpa [#allocation5], 0
    // Predicated region
    $region2: #{tpu_custom_call.1} parent=1 // pred_check
      _
    $region3: #{tpu_custom_call.1} parent=1 // pred_check_branch
      %12 = sbr.rel (0) target = $region5
    $region4: #{tpu_custom_call.1} parent=1 // pred_region
      %14 = vsyncadd [#allocation4], 0
      %s15 = sshll.u32 %s0, 4
      %s16 = int_to_ptr.hbm [resolvable:$true] %s15
      %s17 = sshll.u32 [#allocation3], 4
      %s18 = int_to_ptr.vmem [resolvable:$true] %s17
      %23 = dma.hbm_to_vmem [thread:$0]  %s16, 256, %s18, [#allocation4], 128, 128, 8
    $region5: #{tpu_custom_call.1} parent=1 // pred_fallthru
      _
    // Predicated region
    $region6: #{tpu_custom_call.1} parent=1 // pred_check
      _
    $region7: #{tpu_custom_call.1} parent=1 // pred_check_branch
      %25 = sbr.rel (0) target = $region9
    $region8: #{tpu_custom_call.1} parent=1 // pred_region
      %27 = vsyncadd [#allocation7], 0
      %s28 = sshll.u32 %s1, 4
      %s29 = int_to_ptr.hbm [resolvable:$true] %s28
      %s30 = sshll.u32 [#allocation6], 4
      %s31 = int_to_ptr.vmem [resolvable:$true] %s30
      %36 = dma.hbm_to_vmem [thread:$0]  %s29, 512, %s31, [#allocation7], 128, 128, 8
    $region9: #{tpu_custom_call.1} parent=1 // pred_fallthru
      _
    // Predicated region
    $region10: #{tpu_custom_call.1} parent=1 // pred_check
      _
    $region11: #{tpu_custom_call.1} parent=1 // pred_check_branch
      %38 = sbr.rel (0) target = $region13
    $region12: #{tpu_custom_call.1} parent=1 // pred_region
      _
    $region13: #{tpu_custom_call.1} parent=1 // pred_fallthru
      _
    // Predicated region
    $region14: #{tpu_custom_call.1} parent=1 // pred_check
      _
    $region15: #{tpu_custom_call.1} parent=1 // pred_check_branch
      %40 = sbr.rel (0) target = $region17
    $region16: #{tpu_custom_call.1} parent=1 // pred_region
      %42 = dma.done [#allocation4], 256
    $region17: #{tpu_custom_call.1} parent=1 // pred_fallthru
      _
    // Predicated region
    $region18: #{tpu_custom_call.1} parent=1 // pred_check
      _
    $region19: #{tpu_custom_call.1} parent=1 // pred_check_branch
      %44 = sbr.rel (0) target = $region21
    $region20: #{tpu_custom_call.1} parent=1 // pred_region
      %46 = dma.done [#allocation7], 512
    $region21: #{tpu_custom_call.1} parent=1 // pred_fallthru
      _
    %p47 = scmp.eq.s32.totalorder 0, 0
    // Predicated region
    $region22: #{tpu_custom_call.1} parent=1 // pred_check
      %p48 = pneg %p47
    $region23: #{tpu_custom_call.1} parent=1 // pred_check_branch
      %50 = sbr.rel (%p48) target = $region25
    $region24: #{tpu_custom_call.1} parent=1 // pred_region
      %vm51 = vcmask 261120
      %52 = vst.msk [vmem:[#allocation2] sm:$0xff] %vm51, 0.0
      %53 = vst.msk [vmem:[#allocation2 + $0x8] sm:$0xff] %vm51, 0.0
    $region25: #{tpu_custom_call.1} parent=1 // pred_fallthru
      _
    %v54 = vld [vmem:[#allocation3] sm:$0xff]
    %v55 = vld [vmem:[#allocation3 + $0x8] sm:$0xff]
    %v56 = vld [vmem:[#allocation2] sm:$0xff]
    %v57 = vld [vmem:[#allocation2 + $0x8] sm:$0xff]
    %v58 = vld [vmem:[#allocation6] sm:$0xff]
    %v59 = vld [vmem:[#allocation6 + $0x8] sm:$0xff]
    %v60 = vld [vmem:[#allocation6 + $0x10] sm:$0xff]
    %v61 = vld [vmem:[#allocation6 + $0x18] sm:$0xff]
    %vm62 = vcmask 261120
    %v64 = vsel %vm62, %v54, 0
    %v67 = vsel %vm62, %v55, 0
    %69 = vmatpush.msra.mxu0 0.0
    %70 = vmatpush.msra.mxu0 0.0
    %71 = vmatpush.msra.mxu0 0.0
    %72 = vmatpush.msra.mxu0 0.0
    %73 = vmatpush.msra.mxu0 0.0
    %74 = vmatpush.msra.mxu0 0.0
    %75 = vmatpush.msra.mxu0 0.0
    %76 = vmatpush.msra.mxu0 0.0
    %77 = vmatpush.msra.mxu0 0.0
    %78 = vmatpush.msra.mxu0 0.0
    %79 = vmatpush.msra.mxu0 0.0
    %80 = vmatpush.msra.mxu0 0.0
    %81 = vmatpush.msra.mxu0 %v61
    %82 = vmatpush.msra.mxu0 %v60
    %83 = vmatpush.msra.mxu0 %v59
    %84 = vmatpush.msra.mxu0 %v58
    %85 = vmatmul.f32.gmra.mxu0 %v64
    %v86 = vpop.f32.mrf.mxu0
    %v87 = vadd.f32 0.0, %v86
    %88 = vmatmul.f32.gmra.mxu0 %v67
    %v89 = vpop.f32.mrf.mxu0
    %v90 = vadd.f32 0.0, %v89
    %91 = vdwg.mxu0
    %v92 = vadd.f32 %v56, %v87
    %v93 = vadd.f32 %v57, %v90
    %94 = vst.msk [vmem:[#allocation2] sm:$0xff] %vm62, %v92
    %95 = vst.msk [vmem:[#allocation2 + $0x8] sm:$0xff] %vm62, %v93
    // Predicated region
    $region26: #{tpu_custom_call.1} parent=1 // pred_check
      %p96 = pneg %p47
    $region27: #{tpu_custom_call.1} parent=1 // pred_check_branch
      %98 = sbr.rel (%p96) target = $region29
    $region28: #{tpu_custom_call.1} parent=1 // pred_region
      %v99 = vld [vmem:[#allocation2] sm:$0xff]
      %v100 = vld [vmem:[#allocation2 + $0x8] sm:$0xff]
      %v101 = vld [vmem:[%s2] sm:$0x1]
      %v103 = vperm.slane %v101, 0
      %v105 = vadd.f32 %v99, %v103
      %v106 = vadd.f32 %v100, %v103
      %107 = vst.msk [vmem:[#allocation8] sm:$0xff] %vm62, %v105
      %108 = vst.msk [vmem:[#allocation8 + $0x8] sm:$0xff] %vm62, %v106
    $region29: #{tpu_custom_call.1} parent=1 // pred_fallthru
      _
    // Predicated region
    $region30: #{tpu_custom_call.1} parent=1 // pred_check
      _
    $region31: #{tpu_custom_call.1} parent=1 // pred_check_branch
      %110 = sbr.rel (0) target = $region33
    $region32: #{tpu_custom_call.1} parent=1 // pred_region
      %112 = vsyncadd [#allocation5], 0
      %s113 = sshll.u32 [#allocation8], 4
      %s114 = int_to_ptr.vmem [resolvable:$true] %s113
      %s115 = sshll.u32 %s3, 4
      %s116 = int_to_ptr.hbm [resolvable:$true] %s115
      %121 = dma.vmem_to_hbm [thread:$0]  %s114, 256, %s116, [#allocation5], 128, 128, 8
    $region33: #{tpu_custom_call.1} parent=1 // pred_fallthru
      _
    // Predicated region
    $region34: #{tpu_custom_call.1} parent=1 // pred_check
      _
    $region35: #{tpu_custom_call.1} parent=1 // pred_check_branch
      %123 = sbr.rel (0) target = $region37
    $region36: #{tpu_custom_call.1} parent=1 // pred_region
      %125 = dma.done [#allocation5], 256
    $region37: #{tpu_custom_call.1} parent=1 // pred_fallthru
      _
    %126 = vsyncpa [#allocation4], 1
    %127 = vsyncpa [#allocation7], 1
    %128 = vsyncpa [#allocation5], 1

</llo_original>
